<compile_context>
chip_gen: v7x
topology: tpu7x:2x2x1
jax: 0.10.0
libtpu: 0.0.40
codegen_flags: <defaults>
</compile_context>

<pallas_src>
import math
from functools import partial

import jax
import jax.numpy as jnp
from jax import lax
from jax.experimental import pallas as pl
from jax.experimental.pallas import tpu as pltpu


def _make_pe_table(d_model: int, max_len: int) -> jnp.ndarray:
    """Deterministic sinusoidal table, identical to the PyTorch __init__."""
    position = jnp.arange(0, max_len, dtype=jnp.float32)[:, None]            # (L, 1)
    div_term = jnp.exp(
        jnp.arange(0, d_model, 2, dtype=jnp.float32)
        * -(math.log(10000.0) / d_model)
    )                                                                         # (D/2,)
    pe = jnp.zeros((max_len, d_model), dtype=jnp.float32)
    pe = pe.at[:, 0::2].set(jnp.sin(position * div_term))
    pe = pe.at[:, 1::2].set(jnp.cos(position * div_term))
    return pe[None, :, :]                                                     # (1, L, D)


def _posenc_kernel(x_ref, pe_ref, y_ref, *, xscale: float):
    # Tiled path:  x/pe/y tiles are (tile_r, C)  (batch dim squeezed).
    # Small path:  x/y are (B, R, C), pe is (1, R, C) -> broadcast add.
    x = x_ref[...].astype(jnp.float32)
    pe = pe_ref[...].astype(jnp.float32)
    y_ref[...] = (x * xscale + pe).astype(y_ref.dtype)


def _choose_lane_layout(T: int, D: int, max_cols: int = 4096):
    """Pick a 2-D (rows, cols) view of the (T, D) plane with cols % 128 == 0
    whenever possible, so output stores are lane-dense (unmasked vst)."""
    if D % 128 == 0:
        return T, D
    n = T * D
    c_hi = min(max_cols, n)
    c_hi -= c_hi % 128
    for c in range(c_hi, 127, -128):          # all multiples of 128, largest first
        if n % c == 0:
            return n // c, c
    return T, D  # fallback: still correct, just partial-lane stores


def _choose_row_tile(R: int, C: int, itemsize: int, target_bytes: int = 2 << 20):
    """Largest dtype-aware sublane-aligned row tile with ~target_bytes blocks.
    3 arrays x 2 buffers x 2 MiB = 12 MiB keeps us under v5e's 16 MiB default
    scoped-VMEM while being close to the HBM roofline on v6e/v7x."""
    sub = 8 * max(1, 4 // itemsize)           # 8 (f32) / 16 (bf16) / 32 (int8/fp8)
    rows = target_bytes // (C * itemsize)
    if rows >= R:
        return R
    rows = max(sub, (rows // sub) * sub)
    return min(rows, R)


_SMALL_BYTES = 2 << 20  # below this, one grid step beats any tiling


class PositionalEncoding:
    """JAX/Pallas counterpart of the PyTorch module (dropout == identity)."""

    def __init__(self, d_model: int, dropout_rate: float = 0.0,
                 max_len: int = 5000, reverse: bool = False):
        self.d_model = d_model
        self.xscale = float(math.sqrt(d_model))
        self.max_len = max_len
        self.dropout_rate = dropout_rate
        self.pe = _make_pe_table(d_model, max_len)   # (1, max_len, d_model) f32
        # TODO(synk): dropout is identity here (inference semantics); training
        # mode would need in-kernel PRNG masking (pltpu.prng_seed/prng_random_bits).

    def __call__(self, x: jnp.ndarray, offset: int = 0):
        B, T, D = x.shape
        assert D == self.d_model
        # TODO(synk): tensor-valued offset (F.embedding gather branch) is not
        # supported; Python-int offset only.
        assert offset + T <= self.max_len

        # Slice the table for [offset, offset+T).  This is also the module's
        # second return value, so it is materialized anyway; the kernel streams
        # it as a batch-shared input (read exactly once thanks to grid order).
        pos_emb = lax.dynamic_slice(self.pe, (0, offset, 0), (1, T, D)).astype(x.dtype)

        # Lane-dense 2-D view of the (time, d_model) plane.
        R, C = _choose_lane_layout(T, D)
        itemsize = jnp.dtype(x.dtype).itemsize
        x2 = x.reshape(B, R, C)
        pe2 = pos_emb.reshape(1, R, C)

        kernel = partial(_posenc_kernel, xscale=self.xscale)
        cost = pl.CostEstimate(
            flops=2 * B * T * D,
            transcendentals=0,
            bytes_accessed=(2 * B * T * D + T * D) * itemsize,
        )

        total_bytes = B * R * C * itemsize
        if total_bytes <= _SMALL_BYTES:
            # Single-step kernel: whole arrays as one block; pe is broadcast
            # across batch inside the kernel.  Avoids per-step overhead.
            y2 = pl.pallas_call(
                kernel,
                out_shape=jax.ShapeDtypeStruct((B, R, C), x.dtype),
                cost_estimate=cost,
            )(x2, pe2)
            return y2.reshape(B, T, D), pos_emb

        # Tiled path: row-tiles outer (megacore-splittable), batch innermost so
        # the pe block index is constant across consecutive steps and its DMA
        # is elided (pe read once instead of B times).
        tile_r = _choose_row_tile(R, C, itemsize)
        grid = (pl.cdiv(R, tile_r), B)

        y2 = pl.pallas_call(
            kernel,
            out_shape=jax.ShapeDtypeStruct((B, R, C), x.dtype),
            grid_spec=pltpu.PrefetchScalarGridSpec(
                num_scalar_prefetch=0,
                grid=grid,
                in_specs=[
                    # x: per-(row-tile, batch) block; batch dim squeezed.
                    pl.BlockSpec((None, tile_r, C), lambda r, b: (b, r, 0)),
                    # pos_emb: shared across batch (block index ignores b).
                    pl.BlockSpec((None, tile_r, C), lambda r, b: (0, r, 0)),
                ],
                out_specs=pl.BlockSpec((None, tile_r, C), lambda r, b: (b, r, 0)),
            ),
            compiler_params=pltpu.CompilerParams(
                dimension_semantics=("parallel", "parallel"),
            ),
            cost_estimate=cost,
        )(x2, pe2)

        return y2.reshape(B, T, D), pos_emb


if __name__ == "__main__":
    # --- Small-shape check (single-step path) ------------------------------
    B, T, D = 2, 8, 32
    max_len = 64
    key = jax.random.PRNGKey(0)
    x = jax.random.normal(key, (B, T, D), dtype=jnp.float32)

    module = PositionalEncoding(d_model=D, dropout_rate=0.0, max_len=max_len)
    y, pos_emb = module(x, offset=3)
    jax.block_until_ready((y, pos_emb))

    ref_pe = lax.dynamic_slice(module.pe, (0, 3, 0), (1, T, D))
    ref_y = x * module.xscale + ref_pe
    assert jnp.allclose(y, ref_y, atol=1e-5, rtol=1e-5)
    assert jnp.allclose(pos_emb, ref_pe, atol=1e-5, rtol=1e-5)

    # --- Moderate-shape check (tiled path, batch-innermost grid) -----------
    B2, T2, D2 = 2, 2048, 384
    max_len2 = 4096
    x_big = jax.random.normal(jax.random.PRNGKey(0), (B2, T2, D2), dtype=jnp.float32)

    module2 = PositionalEncoding(d_model=D2, dropout_rate=0.0, max_len=max_len2)
    y_big, pos_emb_big = module2(x_big, offset=5)
    jax.block_until_ready((y_big, pos_emb_big))

    ref_pe2 = lax.dynamic_slice(module2.pe, (0, 5, 0), (1, T2, D2))
    ref_y2 = x_big * module2.xscale + ref_pe2
    assert jnp.allclose(y_big, ref_y2, atol=1e-5, rtol=1e-5)
    assert jnp.allclose(pos_emb_big, ref_pe2, atol=1e-5, rtol=1e-5)

    print("KERNEL_OK")
</pallas_src>

<mosaic_0001>
module attributes {stable_mosaic.version = 11 : i64} {
  func.func @_posenc_kernel(%arg0: memref<2x1x256xf32, #tpu.memory_space<vmem>>, %arg1: memref<1x1x256xf32, #tpu.memory_space<vmem>>, %arg2: memref<2x1x256xf32, #tpu.memory_space<vmem>>) attributes {dimension_semantics = [], scalar_prefetch = 0 : i64, scratch_operands = 0 : i64, tpu.core_type = #tpu.core_type<tc>} {
    %c0 = arith.constant 0 : index
    %c0_0 = arith.constant 0 : index
    %c0_1 = arith.constant 0 : index
    %0 = vector.load %arg0[%c0, %c0_0, %c0_1] : memref<2x1x256xf32, #tpu.memory_space<vmem>>, vector<2x1x256xf32>
    %c0_2 = arith.constant 0 : index
    %c0_3 = arith.constant 0 : index
    %c0_4 = arith.constant 0 : index
    %1 = vector.load %arg1[%c0_2, %c0_3, %c0_4] : memref<1x1x256xf32, #tpu.memory_space<vmem>>, vector<1x1x256xf32>
    %cst = arith.constant 5.65685415 : f32
    %2 = vector.broadcast %cst : f32 to vector<2x1x256xf32>
    %3 = arith.mulf %0, %2 : vector<2x1x256xf32>
    %4 = vector.broadcast %1 : vector<1x1x256xf32> to vector<2x1x256xf32>
    %5 = arith.addf %3, %4 : vector<2x1x256xf32>
    %c0_5 = arith.constant 0 : index
    %c0_6 = arith.constant 0 : index
    %c0_7 = arith.constant 0 : index
    %6 = vector.load %arg2[%c0_5, %c0_6, %c0_7] : memref<2x1x256xf32, #tpu.memory_space<vmem>>, vector<2x1x256xf32>
    tpu.vector_store %arg2[%c0_5, %c0_6, %c0_7], %5 {strides = array<i32>} : memref<2x1x256xf32, #tpu.memory_space<vmem>>, vector<2x1x256xf32>,
    return
  }
}

</mosaic_0001>

<llo_original>
// kernel: tpu_custom_call.1
$region0: #{tpu_custom_call.1}
  #allocation0 [shape = 'u32[]', space=smem, size = 0x4, offset = 0x4, fixed_abs, tag = 'smem constant byte address 0x4 - core index']
  #allocation1 [shape = 'u32[144,128]{1,0:T(1,128)}', space=vmem, size = 0x12000, scoped, tag = 'internal scratch']
  %s0 = inlined_call_operand.hbm [shape: f32[2,1,256], index: 0, kind: input, shape index: {}]
  %s1 = inlined_call_operand.vmem [shape: f32[1,1,256], index: 1, kind: input, shape index: {}]
  %s2 = inlined_call_operand.hbm [shape: f32[2,1,256], index: 2, kind: output, shape index: {}]
  %s3 = sld [smem:[#allocation0]]
  $region22: #{tpu_custom_call.1} parent=0
    _
  %s5 = ssub.s32 1, %s3
  %s6 = scalar_select 0, %s5, %s3
  $region1: #{tpu_custom_call.1} parent=0
    #allocation2 [shape = 'u8[2048]{0}', space=vmem, size = 0x800, scoped, tag = 'input window, operand 0, single buffered']
    #allocation3 [shape = 's32[1]{0}', space=sflag, size = 0x4, scoped, tag = 'scoped memory for tpu_custom_call.1']
    #allocation4 [shape = 's32[1]{0}', space=sflag, size = 0x4, scoped, tag = 'scoped memory for tpu_custom_call.1']
    #allocation5 [shape = 'u8[2048]{0}', space=vmem, size = 0x800, scoped, tag = 'output window, operand 0, single buffered']
    %7 = vsyncpa [#allocation3], 0
    %8 = vsyncpa [#allocation4], 0
    // Predicated region
    $region2: #{tpu_custom_call.1} parent=1 // pred_check
      _
    $region3: #{tpu_custom_call.1} parent=1 // pred_check_branch
      %10 = sbr.rel (0) target = $region5
    $region4: #{tpu_custom_call.1} parent=1 // pred_region
      %s12 = ssub.s32 64, 64
      %13 = vsyncadd [#allocation3], %s12
      %s14 = sshll.u32 [#allocation2], 4
      %s15 = int_to_ptr.vmem [resolvable:$true] %s14
      %20 = dma.hbm_to_vmem [thread:$0]  %s0, 64, %s15, [#allocation3], 32, 32, 2
    $region5: #{tpu_custom_call.1} parent=1 // pred_fallthru
      _
    // Predicated region
    $region6: #{tpu_custom_call.1} parent=1 // pred_check
      _
    $region7: #{tpu_custom_call.1} parent=1 // pred_check_branch
      %22 = sbr.rel (0) target = $region9
    $region8: #{tpu_custom_call.1} parent=1 // pred_region
      _
    $region9: #{tpu_custom_call.1} parent=1 // pred_fallthru
      _
    // Predicated region
    $region10: #{tpu_custom_call.1} parent=1 // pred_check
      _
    $region11: #{tpu_custom_call.1} parent=1 // pred_check_branch
      %24 = sbr.rel (0) target = $region13
    $region12: #{tpu_custom_call.1} parent=1 // pred_region
      %25 = dma.done [#allocation3], 64
    $region13: #{tpu_custom_call.1} parent=1 // pred_fallthru
      _
    %v26 = vld [vmem:[#allocation2] sm:$0x3]
    %v27 = vld [vmem:[#allocation2 + $0x2] sm:$0x3]
    %v28 = vld [vmem:[%s1] sm:$0x3]
    %v29 = vmul.f32 %v26, 5.656854
    %v30 = vmul.f32 %v27, 5.656854
    %v31 = vadd.f32 %v29, %v28
    %v32 = vadd.f32 %v30, %v28
    %v33 = vlaneseq
    %vm34 = vcmp.ge.s32.totalorder %v33, 0
    %vm35 = vcmp.lt.s32.totalorder %v33, 256
    %vm36 = vmand %vm34, %vm35
    %37 = vst.msk [vmem:[#allocation5] sm:$0x3] %vm36, %v31
    %38 = vst.msk [vmem:[#allocation5 + $0x2] sm:$0x3] %vm36, %v32
    // Predicated region
    $region14: #{tpu_custom_call.1} parent=1 // pred_check
      _
    $region15: #{tpu_custom_call.1} parent=1 // pred_check_branch
      %40 = sbr.rel (0) target = $region17
    $region16: #{tpu_custom_call.1} parent=1 // pred_region
      %s42 = ssub.s32 64, 64
      %43 = vsyncadd [#allocation4], %s42
      %s44 = sshll.u32 [#allocation5], 4
      %s45 = int_to_ptr.vmem [resolvable:$true] %s44
      %50 = dma.vmem_to_hbm [thread:$0]  %s45, 64, %s2, [#allocation4], 32, 32, 2
    $region17: #{tpu_custom_call.1} parent=1 // pred_fallthru
      _
    // Predicated region
    $region18: #{tpu_custom_call.1} parent=1 // pred_check
      _
    $region19: #{tpu_custom_call.1} parent=1 // pred_check_branch
      %52 = sbr.rel (0) target = $region21
    $region20: #{tpu_custom_call.1} parent=1 // pred_region
      %53 = dma.done [#allocation4], 64
    $region21: #{tpu_custom_call.1} parent=1 // pred_fallthru
      _
    %54 = vsyncpa [#allocation3], 1
    %55 = vsyncpa [#allocation4], 1

</llo_original>
